<compile_context>
chip_gen: v7x
topology: tpu7x:2x2x1
jax: 0.10.0
libtpu: 0.0.40
codegen_flags: <defaults>
</compile_context>

<pallas_src>
import math

import jax
import jax.numpy as jnp
from jax.experimental import pallas as pl
from jax.experimental.pallas import tpu as pltpu

_LANE = 128  # TPU vreg lane count; the last block dim is always exactly one lane row.


def _lowest_value(dtype):
    dtype = jnp.dtype(dtype)
    if jnp.issubdtype(dtype, jnp.floating):
        return float("-inf")
    if jnp.issubdtype(dtype, jnp.integer):
        return int(jnp.iinfo(dtype).min)
    if dtype == jnp.bool_:
        return False
    raise ValueError(f"unsupported dtype for maxpool: {dtype}")


def _pool_out_dim(d, K, S):
    # PyTorch ceil_mode output size (padding=0, dilation=1), with the
    # "last window must start inside the input" correction.
    o = math.ceil((d - K) / S) + 1
    if (o - 1) * S >= d:
        o -= 1
    return o


def _select_tiling(n_rows, itemsize, n_taps):
    """Pick the row tile TR and scoped-VMEM limit per TPU generation."""
    # dtype-aware sublane alignment: f32 -> 8, bf16 -> 16, int8 -> 32.
    sublane = {4: 8, 2: 16, 1: 32}.get(itemsize, 8)
    try:
        vmem_cap = int(getattr(pltpu.get_tpu_info(), "vmem_capacity_bytes"))
    except Exception:
        vmem_cap = 64 * 1024 * 1024  # conservative fallback: v7x per-TensorCore VMEM
    if vmem_cap <= 64 * 1024 * 1024:        # v7x: 64 MiB physical per TC
        block_budget, vmem_limit = 20 << 20, 32 << 20
    else:                                   # v5e / v6e: 128 MiB physical
        block_budget, vmem_limit = 48 << 20, 64 << 20
    # (n_taps input rows + 1 output row) x 128 lanes, double-buffered by the pipeline.
    bytes_per_row = (n_taps + 1) * _LANE * itemsize * 2
    tr = (block_budget // bytes_per_row) // sublane * sublane
    tr = max(sublane, tr)
    if n_rows <= tr:
        tr = n_rows  # full extent == array dim: always a legal block shape
    return tr, vmem_limit


def _maxpool_kernel(x_ref, o_ref):
    # x_ref block: (1, K*K, TR, 128) tap-major, fully sublane/lane-dense.
    # o_ref block: (1, TR, 128).
    n_taps = x_ref.shape[1]
    taps = [x_ref[0, t] for t in range(n_taps)]      # K*K independent (TR, 128) loads
    # Pairwise tree reduction: per-vreg VPU dependency depth 4 instead of 8.
    while len(taps) > 1:
        nxt = [jnp.maximum(taps[i], taps[i + 1]) for i in range(0, len(taps) - 1, 2)]
        if len(taps) % 2 == 1:
            nxt.append(taps[-1])
        taps = nxt
    o_ref[0] = taps[0]


def maxpool2d_ceil(x, kernel_size=3, stride=None):
    """Equivalent of torch.nn.MaxPool2d(kernel_size, ceil_mode=True) on NCHW input."""
    K = kernel_size
    S = stride if stride is not None else kernel_size
    if S != K:
        raise NotImplementedError("only non-overlapping windows (stride == kernel) supported")

    N, C, H, W = x.shape
    Hout = _pool_out_dim(H, K, S)
    Wout = _pool_out_dim(W, K, S)
    Hp, Wp = Hout * K, Wout * K
    T = K * K
    itemsize = jnp.dtype(x.dtype).itemsize
    lowest = _lowest_value(x.dtype)

    # 1) Ceil-mode overhang padded with the dtype's lowest value; ceil_mode guarantees
    #    every window keeps at least one real element, so the padding never wins a max.
    xp = jnp.pad(x, ((0, 0), (0, 0), (0, Hp - H), (0, Wp - W)), constant_values=lowest)

    # 2) Tap-major permute. Windows don't overlap (stride == kernel), so this is one
    #    x-sized relayout, not a 9x im2col. Flat order is (C, Hout, Wout) so the kernel
    #    output un-flattens directly to NCHW — no post-kernel transpose pass.
    F = C * Hout * Wout
    xv = xp.reshape(N, C, Hout, K, Wout, K)
    xv = jnp.transpose(xv, (0, 3, 5, 1, 2, 4))        # (N, K, K, C, Hout, Wout)
    xv = xv.reshape(N, T, F)

    # 3) Lane-dense view: pad the flat axis to a multiple of 128 and fold it into
    #    (rows, 128) so every kernel block is a stack of fully packed (8,128) vregs.
    Fp = ((F + _LANE - 1) // _LANE) * _LANE
    if Fp != F:
        xv = jnp.pad(xv, ((0, 0), (0, 0), (0, Fp - F)), constant_values=lowest)
    n_rows = Fp // _LANE
    xv = xv.reshape(N, T, n_rows, _LANE)

    TR, vmem_limit = _select_tiling(n_rows, itemsize, T)
    grid = (N, pl.cdiv(n_rows, TR))

    out2 = pl.pallas_call(
        _maxpool_kernel,
        out_shape=jax.ShapeDtypeStruct((N, n_rows, _LANE), x.dtype),
        grid=grid,
        in_specs=[
            pl.BlockSpec((1, T, TR, _LANE), lambda n, r: (n, 0, r, 0)),
        ],
        out_specs=pl.BlockSpec((1, TR, _LANE), lambda n, r: (n, r, 0)),
        compiler_params=pltpu.CompilerParams(
            dimension_semantics=("parallel", "parallel"),
            vmem_limit_bytes=vmem_limit,
        ),
        cost_estimate=pl.CostEstimate(
            flops=(T - 1) * N * Fp,
            transcendentals=0,
            bytes_accessed=(T + 1) * N * Fp * itemsize,
        ),
    )(xv)

    # 4) Un-flatten straight back to NCHW (flat order was C-major).
    out = out2.reshape(N, Fp)
    if Fp != F:
        out = out[:, :F]
    return out.reshape(N, C, Hout, Wout)


def _reference_maxpool(x, kernel_size=3, stride=None):
    """Independent pure-JAX reference: window-by-window, PyTorch ceil_mode semantics."""
    K = kernel_size
    S = stride if stride is not None else kernel_size
    N, C, H, W = x.shape
    Hout = _pool_out_dim(H, K, S)
    Wout = _pool_out_dim(W, K, S)
    rows = []
    for i in range(Hout):
        cols = []
        for j in range(Wout):
            h0, w0 = i * S, j * S
            win = x[:, :, h0:min(h0 + K, H), w0:min(w0 + K, W)]
            cols.append(jnp.max(win, axis=(2, 3)))
        rows.append(jnp.stack(cols, axis=-1))
    return jnp.stack(rows, axis=-2)


if __name__ == "__main__":
    key = jax.random.PRNGKey(0)
    x = jax.random.normal(key, (2, 4, 16, 16), dtype=jnp.float32)

    fn = jax.jit(maxpool2d_ceil)
    out = jax.block_until_ready(fn(x))

    ref = _reference_maxpool(x)
    assert out.shape == (2, 4, 6, 6), out.shape
    assert jnp.allclose(out, ref), "mismatch vs reference maxpool"

    print("KERNEL_OK")
</pallas_src>

<mosaic_0001>
module attributes {stable_mosaic.version = 11 : i64} {
  func.func @_maxpool_kernel(%arg0: i32, %arg1: i32, %arg2: memref<1x9x2x128xf32, #tpu.memory_space<vmem>>, %arg3: memref<1x2x128xf32, #tpu.memory_space<vmem>>) attributes {dimension_semantics = [#tpu.dimension_semantics<parallel>, #tpu.dimension_semantics<parallel>], iteration_bounds = array<i64: 2, 1>, scalar_prefetch = 0 : i64, scratch_operands = 0 : i64, tpu.core_type = #tpu.core_type<tc>, window_params = [{transform_indices = @transform_0, window_bounds = array<i64: 1, 9, 2, 128>}, {transform_indices = @transform_1, window_bounds = array<i64: 1, 2, 128>}]} {
    %c0 = arith.constant 0 : index
    %c0_0 = arith.constant 0 : index
    %c0_1 = arith.constant 0 : index
    %c0_2 = arith.constant 0 : index
    %0 = vector.load %arg2[%c0, %c0_0, %c0_1, %c0_2] : memref<1x9x2x128xf32, #tpu.memory_space<vmem>>, vector<1x1x2x128xf32>
    %1 = vector.shape_cast %0 : vector<1x1x2x128xf32> to vector<2x128xf32>
    %c0_3 = arith.constant 0 : index
    %c1 = arith.constant 1 : index
    %c0_4 = arith.constant 0 : index
    %c0_5 = arith.constant 0 : index
    %2 = vector.load %arg2[%c0_3, %c1, %c0_4, %c0_5] : memref<1x9x2x128xf32, #tpu.memory_space<vmem>>, vector<1x1x2x128xf32>
    %3 = vector.shape_cast %2 : vector<1x1x2x128xf32> to vector<2x128xf32>
    %c0_6 = arith.constant 0 : index
    %c2 = arith.constant 2 : index
    %c0_7 = arith.constant 0 : index
    %c0_8 = arith.constant 0 : index
    %4 = vector.load %arg2[%c0_6, %c2, %c0_7, %c0_8] : memref<1x9x2x128xf32, #tpu.memory_space<vmem>>, vector<1x1x2x128xf32>
    %5 = vector.shape_cast %4 : vector<1x1x2x128xf32> to vector<2x128xf32>
    %c0_9 = arith.constant 0 : index
    %c3 = arith.constant 3 : index
    %c0_10 = arith.constant 0 : index
    %c0_11 = arith.constant 0 : index
    %6 = vector.load %arg2[%c0_9, %c3, %c0_10, %c0_11] : memref<1x9x2x128xf32, #tpu.memory_space<vmem>>, vector<1x1x2x128xf32>
    %7 = vector.shape_cast %6 : vector<1x1x2x128xf32> to vector<2x128xf32>
    %c0_12 = arith.constant 0 : index
    %c4 = arith.constant 4 : index
    %c0_13 = arith.constant 0 : index
    %c0_14 = arith.constant 0 : index
    %8 = vector.load %arg2[%c0_12, %c4, %c0_13, %c0_14] : memref<1x9x2x128xf32, #tpu.memory_space<vmem>>, vector<1x1x2x128xf32>
    %9 = vector.shape_cast %8 : vector<1x1x2x128xf32> to vector<2x128xf32>
    %c0_15 = arith.constant 0 : index
    %c5 = arith.constant 5 : index
    %c0_16 = arith.constant 0 : index
    %c0_17 = arith.constant 0 : index
    %10 = vector.load %arg2[%c0_15, %c5, %c0_16, %c0_17] : memref<1x9x2x128xf32, #tpu.memory_space<vmem>>, vector<1x1x2x128xf32>
    %11 = vector.shape_cast %10 : vector<1x1x2x128xf32> to vector<2x128xf32>
    %c0_18 = arith.constant 0 : index
    %c6 = arith.constant 6 : index
    %c0_19 = arith.constant 0 : index
    %c0_20 = arith.constant 0 : index
    %12 = vector.load %arg2[%c0_18, %c6, %c0_19, %c0_20] : memref<1x9x2x128xf32, #tpu.memory_space<vmem>>, vector<1x1x2x128xf32>
    %13 = vector.shape_cast %12 : vector<1x1x2x128xf32> to vector<2x128xf32>
    %c0_21 = arith.constant 0 : index
    %c7 = arith.constant 7 : index
    %c0_22 = arith.constant 0 : index
    %c0_23 = arith.constant 0 : index
    %14 = vector.load %arg2[%c0_21, %c7, %c0_22, %c0_23] : memref<1x9x2x128xf32, #tpu.memory_space<vmem>>, vector<1x1x2x128xf32>
    %15 = vector.shape_cast %14 : vector<1x1x2x128xf32> to vector<2x128xf32>
    %c0_24 = arith.constant 0 : index
    %c8 = arith.constant 8 : index
    %c0_25 = arith.constant 0 : index
    %c0_26 = arith.constant 0 : index
    %16 = vector.load %arg2[%c0_24, %c8, %c0_25, %c0_26] : memref<1x9x2x128xf32, #tpu.memory_space<vmem>>, vector<1x1x2x128xf32>
    %17 = vector.shape_cast %16 : vector<1x1x2x128xf32> to vector<2x128xf32>
    %18 = arith.maximumf %1, %3 : vector<2x128xf32>
    %19 = arith.maximumf %5, %7 : vector<2x128xf32>
    %20 = arith.maximumf %9, %11 : vector<2x128xf32>
    %21 = arith.maximumf %13, %15 : vector<2x128xf32>
    %22 = arith.maximumf %18, %19 : vector<2x128xf32>
    %23 = arith.maximumf %20, %21 : vector<2x128xf32>
    %24 = arith.maximumf %22, %23 : vector<2x128xf32>
    %25 = arith.maximumf %24, %17 : vector<2x128xf32>
    %c0_27 = arith.constant 0 : index
    %c0_28 = arith.constant 0 : index
    %c0_29 = arith.constant 0 : index
    %26 = vector.load %arg3[%c0_27, %c0_28, %c0_29] : memref<1x2x128xf32, #tpu.memory_space<vmem>>, vector<1x2x128xf32>
    %27 = vector.shape_cast %26 : vector<1x2x128xf32> to vector<2x128xf32>
    %28 = vector.shape_cast %25 : vector<2x128xf32> to vector<1x2x128xf32>
    tpu.vector_store %arg3[%c0_27, %c0_28, %c0_29], %28 {strides = array<i32>} : memref<1x2x128xf32, #tpu.memory_space<vmem>>, vector<1x2x128xf32>,
    return
  }
  func.func @transform_0(%arg0: i32, %arg1: i32) -> (i32, i32, i32, i32) {
    %c0_i32 = arith.constant 0 : i32
    %c0_i32_0 = arith.constant 0 : i32
    %c0_i32_1 = arith.constant 0 : i32
    return %arg0, %c0_i32, %arg1, %c0_i32_0 : i32, i32, i32, i32
  }
  func.func @transform_1(%arg0: i32, %arg1: i32) -> (i32, i32, i32) {
    %c0_i32 = arith.constant 0 : i32
    %c0_i32_0 = arith.constant 0 : i32
    return %arg0, %arg1, %c0_i32 : i32, i32, i32
  }
}

</mosaic_0001>

<llo_original>
// kernel: maxpool2d_ceil.1
$region0: #{maxpool2d_ceil.1}
  #allocation0 [shape = 'u32[]', space=smem, size = 0x4, offset = 0x4, fixed_abs, tag = 'smem constant byte address 0x4 - core index']
  #allocation1 [shape = 'u32[144,128]{1,0:T(1,128)}', space=vmem, size = 0x12000, scoped, tag = 'internal scratch']
  %s0 = inlined_call_operand.vmem [shape: f32[2,9,2,128], index: 0, kind: input, shape index: {}]
  %s1 = inlined_call_operand.vmem [shape: f32[2,2,128], index: 1, kind: output, shape index: {}]
  %s2 = sld [smem:[#allocation0]]
  $region37: #{maxpool2d_ceil.1} parent=0
    _
  %s4 = ssub.s32 1, %s2
  %s5 = scalar_select 0, %s4, %s2
  loop: start=0, step=1, limit=4
  $region2: #{maxpool2d_ceil.1} parent=0 // loop_pre_header
    _
  $region3: #{maxpool2d_ceil.1} parent=0 // loop_header
    %s7 = sphi 0, %s11
    %p8 = scmp.ge.s32.totalorder %s7, 4
    %s14 = sphi 0, %s26
    %s15 = sphi 0, %s22
    %s16 = sphi 0, %s14
    %s17 = sphi 0, %s15
    %s18 = sphi 0, %s16
    %s19 = sphi 0, %s17
    %s31 = sphi 0, %s33
    %s34 = sphi 0, %s31
    %s35 = sphi 0, %s34
    %s51 = sphi 0, %s35
    %s59 = sphi 0, %s61
    %s62 = sphi 0, %s59
    %s63 = sphi 0, %s62
    %s79 = sphi 0, %s63
  $region4: #{maxpool2d_ceil.1} parent=0 // loop_header_branch
    %10 = sbr.rel (%p8) target = $region8
  $region5: #{maxpool2d_ceil.1} parent=0 // loop_body
    %s12 = ssub.s32 %s7, 1
    %s13 = ssub.s32 %s7, 2
    %s20 = sadd.s32 1, %s15
    %p21 = scmp.ge.s32.totalorder %s20, 1
    %s22 = scalar_select %p21, 0, %s20
    %s23 = sadd.s32 1, %s14
    %s24 = scalar_select %p21, %s23, %s14
    %p25 = scmp.ge.s32.totalorder %s24, 2
    %s26 = scalar_select %p25, 0, %s24
    %s27 = ssub.s32 %s14, %s26
    %s28 = ssub.s32 %s15, %s22
    %s29 = sor.u32 %s27, %s28
    %p30 = scmp.eq.s32.totalorder %s29, 0
    %s32 = sadd.s32 %s31, 1
    %s33 = scalar_select %p30, %s31, %s32
    %p36 = pneg %p30
    %p37 = scmp.eq.s32.totalorder %s7, 1
    %p38 = por %p36, %p37
    %p39 = scmp.ne.s32.totalorder %s31, %s34
    %p40 = scmp.eq.s32.totalorder %s7, 0
    %p41 = por %p39, %p40
    %p42 = scmp.ne.s32.totalorder %s31, %s34
    %p43 = scmp.eq.s32.totalorder %s12, 1
    %p44 = por %p42, %p43
    %p45 = scmp.ne.s32.totalorder %s34, %s35
    %p46 = scmp.eq.s32.totalorder %s12, 0
    %p47 = por %p45, %p46
    %p48 = scmp.ne.s32.totalorder %s34, %s35
    %p49 = scmp.eq.s32.totalorder %s13, 1
    %p50 = por %p48, %p49
    %p52 = scmp.ne.s32.totalorder %s35, %s51
    %p53 = scmp.eq.s32.totalorder %s13, 0
    %p54 = por %p52, %p53
    %s55 = ssub.s32 %s14, %s26
    %s56 = ssub.s32 %s15, %s22
    %s57 = sor.u32 %s55, %s56
    %p58 = scmp.eq.s32.totalorder %s57, 0
    %s60 = sadd.s32 %s59, 1
    %s61 = scalar_select %p58, %s59, %s60
    %p64 = pneg %p58
    %p65 = scmp.eq.s32.totalorder %s7, 1
    %p66 = por %p64, %p65
    %p67 = scmp.ne.s32.totalorder %s59, %s62
    %p68 = scmp.eq.s32.totalorder %s7, 0
    %p69 = por %p67, %p68
    %p70 = scmp.ne.s32.totalorder %s59, %s62
    %p71 = scmp.eq.s32.totalorder %s12, 1
    %p72 = por %p70, %p71
    %p73 = scmp.ne.s32.totalorder %s62, %s63
    %p74 = scmp.eq.s32.totalorder %s12, 0
    %p75 = por %p73, %p74
    %p76 = scmp.ne.s32.totalorder %s62, %s63
    %p77 = scmp.eq.s32.totalorder %s13, 1
    %p78 = por %p76, %p77
    %p80 = scmp.ne.s32.totalorder %s63, %s79
    %p81 = scmp.eq.s32.totalorder %s13, 0
    %p82 = por %p80, %p81
    %p83 = scmp.le.s32.totalorder 1, %s7
    %p84 = scmp.lt.s32.totalorder %s7, 3
    %p85 = pnand %p83, %p84
    %p86 = pneg %p85
    // Predicated region
    $region9: #{maxpool2d_ceil.1} parent=5 // pred_check
      _
    $region10: #{maxpool2d_ceil.1} parent=5 // pred_check_branch
      %88 = sbr.rel (%p85) target = $region12
    $region11: #{maxpool2d_ceil.1} parent=5 // pred_region
      %s89 = ssub.s32 %s7, 1
    $region12: #{maxpool2d_ceil.1} parent=5 // pred_fallthru
      _
    %p90 = scmp.lt.s32.totalorder %s7, 2
    // Predicated region
    $region13: #{maxpool2d_ceil.1} parent=5 // pred_check
      %p91 = pneg %p90
    $region14: #{maxpool2d_ceil.1} parent=5 // pred_check_branch
      %93 = sbr.rel (%p91) target = $region16
    $region15: #{maxpool2d_ceil.1} parent=5 // pred_region
      // Predicated region
      $region17: #{maxpool2d_ceil.1} parent=15 // pred_check
        %p94 = pneg %p41
      $region18: #{maxpool2d_ceil.1} parent=15 // pred_check_branch
        %96 = sbr.rel (%p94) target = $region20
      $region19: #{maxpool2d_ceil.1} parent=15 // pred_region
        %p97 = scmp.lt.s32.totalorder %s14, 1
        %s98 = scalar_select %p97, %s14, 1
        %p99 = scmp.lt.s32.totalorder %s15, 0
        %s100 = scalar_select %p99, %s15, 0
        %s101 = smul.addr %s98, 9
        %s102 = sadd.s32 %s100, %s101
        %s103 = smul.addr %s102, 2
        %s104 = scalar_lea.vmem %s0, %s103
      $region20: #{maxpool2d_ceil.1} parent=15 // pred_fallthru
        _
    $region16: #{maxpool2d_ceil.1} parent=5 // pred_fallthru
      _
    %p105 = scmp.le.s32.totalorder 1, %s7
    %p106 = scmp.lt.s32.totalorder %s7, 3
    %p107 = pnand %p105, %p106
    %p108 = pneg %p107
    // Predicated region
    $region21: #{maxpool2d_ceil.1} parent=5 // pred_check
      _
    $region22: #{maxpool2d_ceil.1} parent=5 // pred_check_branch
      %110 = sbr.rel (%p107) target = $region24
    $region23: #{maxpool2d_ceil.1} parent=5 // pred_region
      %s111 = ssub.s32 %s7, 1
      %p112 = scmp.lt.s32.totalorder %s16, 1
      %s113 = scalar_select %p112, %s16, 1
      %p114 = scmp.lt.s32.totalorder %s17, 0
      %s115 = scalar_select %p114, %s17, 0
      %s116 = smul.addr %s113, 9
      %s117 = sadd.s32 %s115, %s116
      %s118 = smul.addr %s117, 2
      %s119 = scalar_lea.vmem %s0, %s118
      %p120 = pneg %p47
      %p121 = pneg %p44
      %p122 = pneg %p75
      %p123 = pneg %p72
      %p124 = scmp.lt.s32.totalorder %s16, 1
      %s125 = scalar_select %p124, %s16, 1
      %p126 = scmp.lt.s32.totalorder %s17, 0
      %s127 = scalar_select %p126, %s17, 0
      %s128 = sadd.s32 %s127, %s125
      %s129 = smul.addr %s128, 2
      %s130 = scalar_lea.vmem %s1, %s129
      %p131 = scmp.lt.s32.totalorder %s16, 1
      %s132 = scalar_select %p131, %s16, 1
      %p133 = scmp.lt.s32.totalorder %s17, 0
      %s134 = scalar_select %p133, %s17, 0
      %s135 = smul.addr %s132, 9
      %s136 = sadd.s32 %s134, %s135
      %s137 = smul.addr %s136, 2
      %s138 = scalar_lea.vmem %s0, %s137
      %p139 = scmp.lt.s32.totalorder %s16, 1
      %s140 = scalar_select %p139, %s16, 1
      %p141 = scmp.lt.s32.totalorder %s17, 0
      %s142 = scalar_select %p141, %s17, 0
      %s143 = sadd.s32 %s142, %s140
      %s144 = smul.addr %s143, 2
      %s145 = scalar_lea.vmem %s1, %s144
      %v146 = vld [vmem:[%s138] sm:$0x3]
      %s147 = scalar_lea.vmem %s138, 2
      %v148 = vld [vmem:[%s147] sm:$0x3]
      %s149 = scalar_lea.vmem %s138, 4
      %v150 = vld [vmem:[%s149] sm:$0x3]
      %s151 = scalar_lea.vmem %s138, 6
      %v152 = vld [vmem:[%s151] sm:$0x3]
      %s153 = scalar_lea.vmem %s138, 8
      %v154 = vld [vmem:[%s153] sm:$0x3]
      %s155 = scalar_lea.vmem %s138, 10
      %v156 = vld [vmem:[%s155] sm:$0x3]
      %s157 = scalar_lea.vmem %s138, 12
      %v158 = vld [vmem:[%s157] sm:$0x3]
      %s159 = scalar_lea.vmem %s138, 14
      %v160 = vld [vmem:[%s159] sm:$0x3]
      %s161 = scalar_lea.vmem %s138, 16
      %v162 = vld [vmem:[%s161] sm:$0x3]
      %v163 = vmax.f32 %v146, %v148
      %v164 = vmax.f32 %v150, %v152
      %v165 = vmax.f32 %v154, %v156
      %v166 = vmax.f32 %v158, %v160
      %v167 = vmax.f32 %v163, %v164
      %v168 = vmax.f32 %v165, %v166
      %v169 = vmax.f32 %v167, %v168
      %v170 = vmax.f32 %v169, %v162
      %171 = vst [vmem:[%s145] sm:$0x3] %v170
      %p172 = scmp.lt.s32.totalorder %s16, 1
      %s173 = scalar_select %p172, %s16, 1
      %p174 = scmp.lt.s32.totalorder %s17, 0
      %s175 = scalar_select %p174, %s17, 0
      %s176 = sadd.s32 %s175, %s173
      %s177 = smul.addr %s176, 2
      %s178 = scalar_lea.vmem %s1, %s177
      // Predicated region
      $region25: #{maxpool2d_ceil.1} parent=23 // pred_check
        %p179 = pneg %p72
      $region26: #{maxpool2d_ceil.1} parent=23 // pred_check_branch
        %181 = sbr.rel (%p179) target = $region28
      $region27: #{maxpool2d_ceil.1} parent=23 // pred_region
        _
      $region28: #{maxpool2d_ceil.1} parent=23 // pred_fallthru
        _
    $region24: #{maxpool2d_ceil.1} parent=5 // pred_fallthru
      _
    %p182 = scmp.le.s32.totalorder 2, %s7
    // Predicated region
    $region29: #{maxpool2d_ceil.1} parent=5 // pred_check
      %p183 = pneg %p182
    $region30: #{maxpool2d_ceil.1} parent=5 // pred_check_branch
      %185 = sbr.rel (%p183) target = $region32
    $region31: #{maxpool2d_ceil.1} parent=5 // pred_region
      %s186 = ssub.s32 %s7, 2
      // Predicated region
      $region33: #{maxpool2d_ceil.1} parent=31 // pred_check
        %p187 = pneg %p78
      $region34: #{maxpool2d_ceil.1} parent=31 // pred_check_branch
        %189 = sbr.rel (%p187) target = $region36
      $region35: #{maxpool2d_ceil.1} parent=31 // pred_region
        %p190 = scmp.lt.s32.totalorder %s18, 1
        %s191 = scalar_select %p190, %s18, 1
        %p192 = scmp.lt.s32.totalorder %s19, 0
        %s193 = scalar_select %p192, %s19, 0
        %s194 = sadd.s32 %s193, %s191
        %s195 = smul.addr %s194, 2
        %s196 = scalar_lea.vmem %s1, %s195
      $region36: #{maxpool2d_ceil.1} parent=31 // pred_fallthru
        _
    $region32: #{maxpool2d_ceil.1} parent=5 // pred_fallthru
      _
  $region6: #{maxpool2d_ceil.1} parent=0 // loop_footer
    %s11 = sadd.s32 1, %s7
  $region7: #{maxpool2d_ceil.1} parent=0 // loop_footer_branch
    %6 = sbr.rel target = $region3
  $region8: #{maxpool2d_ceil.1} parent=0 // loop_exit
    _

</llo_original>
